<compile_context>
chip_gen: v7x
topology: tpu7x:2x2x1
jax: 0.10.0
libtpu: 0.0.40
codegen_flags: <defaults>
</compile_context>

<pallas_src>
from functools import partial

import jax
import jax.numpy as jnp
import numpy as np
from jax.experimental import pallas as pl
from jax.experimental.pallas import tpu as pltpu


def _cdiv(a, b):
    return -(-a // b)


def _round_up(v, m):
    return _cdiv(v, m) * m


def _patch_embed_kernel(x_ref, w_ref, add_ref, o_ref):
    # x_ref  : (tm, K)   streamed patch rows (compute dtype)
    # w_ref  : (K, E)    projection weight, grid-invariant (resident)
    # add_ref: (tm, E)   pos+bias rows  OR  (1, E) bias only (broadcast), f32
    # o_ref  : (tm, E)   output rows (out dtype)
    acc = jnp.dot(x_ref[...], w_ref[...], preferred_element_type=jnp.float32)
    o_ref[...] = (acc + add_ref[...]).astype(o_ref.dtype)


def _vmem_budget():
    """Generation-aware scoped-VMEM limit + working-set budget for tile sizing."""
    try:
        info = pltpu.get_tpu_info()
        cap = int(getattr(info, "vmem_capacity_bytes", 128 * 1024 * 1024))
    except Exception:
        cap = 128 * 1024 * 1024
    # ~half the physical VMEM, capped at 64 MiB (v5e/v6e: 64 MiB, v7x: 32 MiB), floor 16 MiB.
    limit = max(min(cap // 2, 64 * 1024 * 1024), 16 * 1024 * 1024)
    return limit, int(limit * 0.7)  # leave headroom for compiler scratch


def _choose_tm(N, K, E, x_isz, w_isz, out_isz, pos_rows, sublane, tm_max, vmem_budget):
    """Pick the row-tile tm and the (possibly padded) per-batch row count Npad.

    Prefers exact divisors of N (no padding / no final slice), MXU-friendly multiples of
    256 then 128, and multiples of 16 on the bf16 path. Falls back to padding N per batch
    when no usable divisor exists (e.g. N=196)."""
    def fits(tm):
        add_rows = tm if pos_rows else 1
        est = (2 * K * E * w_isz            # weight (pipeline double-buffers it)
               + 2 * tm * K * x_isz         # streamed X tile
               + 2 * add_rows * E * 4       # pos+bias tile (f32)
               + 2 * tm * E * out_isz)      # output tile
        return est <= vmem_budget

    # 1) exact divisors of N (zero waste, zero extra HBM passes).
    for step in ((sublane, 8) if sublane != 8 else (8,)):
        divs = [d for d in range(step, min(N, tm_max) + 1, step)
                if N % d == 0 and fits(d)]
        if divs:
            return max(divs, key=lambda d: (d % 256 == 0, d % 128 == 0, d)), N

    # 2) no usable divisor: pad N per batch; minimise wasted rows, then prefer alignment.
    hi = min(tm_max, _round_up(N, sublane))
    cands = [t for t in range(sublane, hi + 1, sublane) if fits(t)] or [sublane]

    def score(t):
        npad = _round_up(N, t)
        return (-(npad - N), t % 256 == 0, t % 128 == 0, t)

    tm = max(cands, key=score)
    return tm, _round_up(N, tm)


@partial(jax.jit, static_argnames=("patch_size", "pos_embed_flag", "compute_dtype",
                                   "out_dtype", "tm_max"))
def patch_embed(x, weight, bias, pos_embed=None, *, patch_size, pos_embed_flag=True,
                compute_dtype=jnp.bfloat16, out_dtype=None, tm_max=512):
    """
    x:         (B, C, H, W) float32 (NCHW, like the PyTorch module)
    weight:    (E, C, p, p) conv kernel, stride == kernel == p
    bias:      (E,)
    pos_embed: (1, N, E) with N = (H//p)**2   (only used if pos_embed_flag)
    compute_dtype: matmul-operand dtype (default bf16; accumulation always f32 on the MXU)
    out_dtype: output dtype (default: x.dtype)
    returns:   (B, N, E)
    """
    B, C, H, W = x.shape
    assert H == W, "module asserts square input"
    E = weight.shape[0]
    p = patch_size
    assert H % p == 0
    Hp = H // p
    N = Hp * Hp
    K = C * p * p

    cdt = jnp.dtype(compute_dtype) if compute_dtype is not None else jnp.dtype(x.dtype)
    odt = jnp.dtype(out_dtype) if out_dtype is not None else jnp.dtype(x.dtype)

    vmem_limit, vmem_budget = _vmem_budget()
    sublane = 16 if cdt.itemsize == 2 else 8
    tm, Npad = _choose_tm(N, K, E, cdt.itemsize, cdt.itemsize, odt.itemsize,
                          pos_embed_flag, sublane, tm_max, vmem_budget)
    n_blocks = Npad // tm

    # ---- host-side glue (fused by XLA under jit): patchify + compute-dtype cast, one pass.
    # Non-overlapping conv (stride == kernel) is an exact matmul over patch rows.
    xp = (x.astype(cdt)
            .reshape(B, C, Hp, p, Hp, p)
            .transpose(0, 2, 4, 1, 3, 5)
            .reshape(B, N, K))
    if Npad != N:
        xp = jnp.pad(xp, ((0, 0), (0, Npad - N), (0, 0)))
    xp = xp.reshape(B * Npad, K)
    w2d = weight.reshape(E, K).T.astype(cdt)                      # (K, E), grid-invariant

    # Additive term: conv bias folded into pos_embed (or used alone) -> one VPU add, never
    # tiled over the batch.
    if pos_embed_flag:
        add = pos_embed.reshape(N, E).astype(jnp.float32) + bias.astype(jnp.float32)[None, :]
        if Npad != N:
            add = jnp.pad(add, ((0, Npad - N), (0, 0)))
        add_block, add_index = (tm, E), (lambda n, b: (n, 0))     # constant over inner b axis
    else:
        add = bias.astype(jnp.float32).reshape(1, E)
        add_block, add_index = (1, E), (lambda n, b: (0, 0))

    row_index = lambda n, b: (b * n_blocks + n, 0)

    out2d = pl.pallas_call(
        _patch_embed_kernel,
        out_shape=jax.ShapeDtypeStruct((B * Npad, E), odt),
        grid_spec=pltpu.PrefetchScalarGridSpec(
            num_scalar_prefetch=0,
            grid=(n_blocks, B),                            # batch innermost: pos+bias tile is
            in_specs=[                                     # DMA'd once per row-block
                pl.BlockSpec((tm, K), row_index),          # streamed patch rows
                pl.BlockSpec((K, E), lambda n, b: (0, 0)), # weight (fetched once, resident)
                pl.BlockSpec(add_block, add_index),        # pos+bias rows / bias row
            ],
            out_specs=pl.BlockSpec((tm, E), row_index),
        ),
        compiler_params=pltpu.CompilerParams(
            dimension_semantics=("parallel", "parallel"),
            vmem_limit_bytes=vmem_limit,
        ),
    )(xp, w2d, add)

    out = out2d.reshape(B, Npad, E)
    if Npad != N:
        out = out[:, :N, :]            # only when N had to be padded (e.g. N=196)
    return out


def _reference(x, weight, bias, pos_embed, patch_size, pos_embed_flag=True):
    """Pure-JAX reference replicating nn.Conv2d(stride=kernel) + flatten(2).transpose(1,2)."""
    B, C, H, W = x.shape
    E = weight.shape[0]
    p = patch_size
    Hp = H // p
    xp = (x.reshape(B, C, Hp, p, Hp, p)
            .transpose(0, 2, 4, 1, 3, 5)
            .reshape(B, Hp * Hp, C * p * p))
    y = jnp.einsum("bnk,ek->bne", xp, weight.reshape(E, -1)) + bias[None, None, :]
    if pos_embed_flag:
        y = y + pos_embed
    return y


if __name__ == "__main__":
    key = jax.random.PRNGKey(0)

    def run_case(idx, B, C, H, p, E, pos_flag, compute_dtype, out_dtype, rtol, atol):
        N = (H // p) ** 2
        kx, kw, kb, kpos = jax.random.split(jax.random.fold_in(key, idx), 4)
        x = jax.random.normal(kx, (B, C, H, H), dtype=jnp.float32)
        weight = jax.random.normal(kw, (E, C, p, p), dtype=jnp.float32) * 0.05
        bias = jax.random.normal(kb, (E,), dtype=jnp.float32) * 0.05
        pos = jax.random.normal(kpos, (1, N, E), dtype=jnp.float32) * 0.02
        out = patch_embed(x, weight, bias, pos, patch_size=p, pos_embed_flag=pos_flag,
                          compute_dtype=compute_dtype, out_dtype=out_dtype)
        out = jax.block_until_ready(out)
        ref = _reference(x, weight, bias, pos, p, pos_embed_flag=pos_flag)
        assert out.shape == (B, N, E), out.shape
        np.testing.assert_allclose(np.asarray(out, dtype=np.float32), np.asarray(ref),
                                   rtol=rtol, atol=atol)

    # 1) module-like 1x1-conv patchify, exact f32 path, non-lane-aligned K/E (full-dim blocks)
    run_case(0, 2, 16, 16, 1, 32, True, jnp.float32, None, 1e-5, 1e-5)
    # 2) bf16 operands (default), bias-only additive path (pos_embed_flag=False), bf16 output
    run_case(1, 2, 8, 16, 2, 32, False, jnp.bfloat16, jnp.bfloat16, 3e-2, 3e-2)
    # 3) lane-aligned dims (K=E=128), bf16 operands, f32 accumulation + f32 output
    run_case(2, 2, 32, 16, 2, 128, True, jnp.bfloat16, None, 2e-2, 2e-2)
    # 4) N=196 (no multiple-of-8 divisor): exercises the per-batch row-padding path
    run_case(3, 2, 4, 28, 2, 32, True, jnp.bfloat16, None, 2e-2, 2e-2)

    print("KERNEL_OK")
</pallas_src>

<mosaic_0001>
module attributes {stable_mosaic.version = 11 : i64} {
  func.func @_patch_embed_kernel(%arg0: i32, %arg1: i32, %arg2: memref<256x16xf32, #tpu.memory_space<vmem>>, %arg3: memref<16x32xf32, #tpu.memory_space<vmem>>, %arg4: memref<256x32xf32, #tpu.memory_space<vmem>>, %arg5: memref<256x32xf32, #tpu.memory_space<vmem>>) attributes {dimension_semantics = [#tpu.dimension_semantics<parallel>, #tpu.dimension_semantics<parallel>], iteration_bounds = array<i64: 1, 2>, scalar_prefetch = 0 : i64, scratch_operands = 0 : i64, tpu.core_type = #tpu.core_type<tc>, window_params = [{transform_indices = @transform_0, window_bounds = array<i64: 256, 16>}, {pipeline_mode = #tpu.pipeline_mode<synchronous>, transform_indices = @transform_1, window_bounds = array<i64: 16, 32>}, {transform_indices = @transform_2, window_bounds = array<i64: 256, 32>}, {transform_indices = @transform_3, window_bounds = array<i64: 256, 32>}]} {
    %c0 = arith.constant 0 : index
    %c0_0 = arith.constant 0 : index
    %0 = vector.load %arg2[%c0, %c0_0] : memref<256x16xf32, #tpu.memory_space<vmem>>, vector<256x16xf32>
    %c0_1 = arith.constant 0 : index
    %c0_2 = arith.constant 0 : index
    %1 = vector.load %arg3[%c0_1, %c0_2] : memref<16x32xf32, #tpu.memory_space<vmem>>, vector<16x32xf32>
    %cst = arith.constant dense<0.000000e+00> : vector<256x32xf32>
    %2 = tpu.matmul %0, %1, %cst {dimension_numbers = #tpu.dot_dimension_numbers<[1], [0], [0], [1], [0, 0, 1, 1], [], []>} : vector<256x16xf32>, vector<16x32xf32>, vector<256x32xf32> -> vector<256x32xf32>
    %c0_3 = arith.constant 0 : index
    %c0_4 = arith.constant 0 : index
    %3 = vector.load %arg4[%c0_3, %c0_4] : memref<256x32xf32, #tpu.memory_space<vmem>>, vector<256x32xf32>
    %4 = arith.addf %2, %3 : vector<256x32xf32>
    %c0_5 = arith.constant 0 : index
    %c0_6 = arith.constant 0 : index
    %5 = vector.load %arg5[%c0_5, %c0_6] : memref<256x32xf32, #tpu.memory_space<vmem>>, vector<256x32xf32>
    tpu.vector_store %arg5[%c0_5, %c0_6], %4 {strides = array<i32>} : memref<256x32xf32, #tpu.memory_space<vmem>>, vector<256x32xf32>,
    return
  }
  func.func @transform_0(%arg0: i32, %arg1: i32) -> (i32, i32) {
    %c1_i32 = arith.constant 1 : i32
    %0 = arith.muli %arg1, %c1_i32 : i32
    %1 = arith.addi %0, %arg0 : i32
    %c0_i32 = arith.constant 0 : i32
    %c0_i32_0 = arith.constant 0 : i32
    return %1, %c0_i32 : i32, i32
  }
  func.func @transform_1(%arg0: i32, %arg1: i32) -> (i32, i32) {
    %c0_i32 = arith.constant 0 : i32
    %c0_i32_0 = arith.constant 0 : i32
    %c0_i32_1 = arith.constant 0 : i32
    return %c0_i32, %c0_i32_0 : i32, i32
  }
  func.func @transform_2(%arg0: i32, %arg1: i32) -> (i32, i32) {
    %c0_i32 = arith.constant 0 : i32
    %c0_i32_0 = arith.constant 0 : i32
    return %arg0, %c0_i32 : i32, i32
  }
  func.func @transform_3(%arg0: i32, %arg1: i32) -> (i32, i32) {
    %c1_i32 = arith.constant 1 : i32
    %0 = arith.muli %arg1, %c1_i32 : i32
    %1 = arith.addi %0, %arg0 : i32
    %c0_i32 = arith.constant 0 : i32
    %c0_i32_0 = arith.constant 0 : i32
    return %1, %c0_i32 : i32, i32
  }
}

</mosaic_0001>

<llo_original>
// kernel: patch_embed.1
$region0: #{patch_embed.1}
  #allocation0 [shape = 'u32[]', space=smem, size = 0x4, offset = 0x4, fixed_abs, tag = 'smem constant byte address 0x4 - core index']
  #allocation1 [shape = 'u32[144,128]{1,0:T(1,128)}', space=vmem, size = 0x12000, scoped, tag = 'internal scratch']
  %s0 = inlined_call_operand.hbm [shape: f32[512,16], index: 0, kind: input, shape index: {}]
  %s1 = inlined_call_operand.hbm [shape: f32[16,32], index: 1, kind: input, shape index: {}]
  %s2 = inlined_call_operand.hbm [shape: f32[256,32], index: 2, kind: input, shape index: {}]
  %s3 = inlined_call_operand.hbm [shape: f32[512,32], index: 3, kind: output, shape index: {}]
  %s4 = sld [smem:[#allocation0]]
  $region57: #{patch_embed.1} parent=0
    _
  %s6 = ssub.s32 1, %s4
  %s7 = scalar_select 0, %s6, %s4
  $region1: #{patch_embed.1} parent=0
    #allocation2 [shape = 'u8[262144]{0}', space=vmem, size = 0x40000, scoped, tag = 'input window, operand 0']
    #allocation3 [shape = 's32[2]{0}', space=sflag, size = 0x8, scoped, tag = 'scoped memory for patch_embed.1']
    #allocation4 [shape = 's32[2]{0}', space=sflag, size = 0x8, scoped, tag = 'scoped memory for patch_embed.1']
    #allocation5 [shape = 'u8[8192]{0}', space=vmem, size = 0x2000, scoped, tag = 'input window, operand 1, single buffered']
    #allocation6 [shape = 's32[1]{0}', space=sflag, size = 0x4, scoped, tag = 'scoped memory for patch_embed.1']
    #allocation7 [shape = 'u8[131072]{0}', space=vmem, size = 0x20000, scoped, tag = 'input window, operand 2, single buffered']
    #allocation8 [shape = 'u8[262144]{0}', space=vmem, size = 0x40000, scoped, tag = 'output window, operand 0']
    %8 = vsyncpa [#allocation3], 0
    %s9 = scalar_lea.sflag [#allocation3], 1
    %10 = vsyncpa %s9, 0
    %11 = vsyncpa [#allocation6], 0
    %12 = vsyncpa [#allocation4], 0
    %s13 = scalar_lea.sflag [#allocation4], 1
    %14 = vsyncpa %s13, 0
    loop: start=0, step=1, limit=4
    $region2: #{patch_embed.1} parent=1 // loop_pre_header
      _
    $region3: #{patch_embed.1} parent=1 // loop_header
      %s16 = sphi 0, %s20
      %p17 = scmp.ge.s32.totalorder %s16, 4
      %s23 = sphi 0, %s35
      %s24 = sphi 0, %s31
      %s25 = sphi 0, %s23
      %s26 = sphi 0, %s24
      %s27 = sphi 0, %s25
      %s28 = sphi 0, %s26
      %s40 = sphi 0, %s42
      %s43 = sphi 0, %s40
      %s44 = sphi 0, %s43
      %s60 = sphi 0, %s44
      %s64 = sphi 0, %s64
      %s66 = sphi 0, %s64
      %s67 = sphi 0, %s66
      %s81 = sphi 0, %s67
      %s87 = sphi 0, %s89
      %s90 = sphi 0, %s87
      %s91 = sphi 0, %s90
      %s107 = sphi 0, %s91
      %s115 = sphi 0, %s117
      %s118 = sphi 0, %s115
      %s119 = sphi 0, %s118
      %s135 = sphi 0, %s119
    $region4: #{patch_embed.1} parent=1 // loop_header_branch
      %19 = sbr.rel (%p17) target = $region8
    $region5: #{patch_embed.1} parent=1 // loop_body
      %s21 = ssub.s32 %s16, 1
      %s22 = ssub.s32 %s16, 2
      %s29 = sadd.s32 1, %s24
      %p30 = scmp.ge.s32.totalorder %s29, 2
      %s31 = scalar_select %p30, 0, %s29
      %s32 = sadd.s32 1, %s23
      %s33 = scalar_select %p30, %s32, %s23
      %p34 = scmp.ge.s32.totalorder %s33, 1
      %s35 = scalar_select %p34, 0, %s33
      %s36 = sadd.s32 %s24, %s23
      %s37 = sadd.s32 %s31, %s35
      %s38 = ssub.s32 %s36, %s37
      %p39 = scmp.eq.s32.totalorder %s38, 0
      %s41 = sadd.s32 %s40, 1
      %s42 = scalar_select %p39, %s40, %s41
      %p45 = pneg %p39
      %p46 = scmp.eq.s32.totalorder %s16, 1
      %p47 = por %p45, %p46
      %p48 = scmp.ne.s32.totalorder %s40, %s43
      %p49 = scmp.eq.s32.totalorder %s16, 0
      %p50 = por %p48, %p49
      %p51 = scmp.ne.s32.totalorder %s40, %s43
      %p52 = scmp.eq.s32.totalorder %s21, 1
      %p53 = por %p51, %p52
      %p54 = scmp.ne.s32.totalorder %s43, %s44
      %p55 = scmp.eq.s32.totalorder %s21, 0
      %p56 = por %p54, %p55
      %p57 = scmp.ne.s32.totalorder %s43, %s44
      %p58 = scmp.eq.s32.totalorder %s22, 1
      %p59 = por %p57, %p58
      %p61 = scmp.ne.s32.totalorder %s44, %s60
      %p62 = scmp.eq.s32.totalorder %s22, 0
      %p63 = por %p61, %p62
      %s65 = sadd.s32 %s64, 1
      %p68 = scmp.eq.s32.totalorder %s16, 1
      %p69 = scmp.ne.s32.totalorder %s64, %s66
      %p70 = scmp.eq.s32.totalorder %s16, 0
      %p71 = por %p69, %p70
      %p72 = scmp.ne.s32.totalorder %s64, %s66
      %p73 = scmp.eq.s32.totalorder %s21, 1
      %p74 = por %p72, %p73
      %p75 = scmp.ne.s32.totalorder %s66, %s67
      %p76 = scmp.eq.s32.totalorder %s21, 0
      %p77 = por %p75, %p76
      %p78 = scmp.ne.s32.totalorder %s66, %s67
      %p79 = scmp.eq.s32.totalorder %s22, 1
      %p80 = por %p78, %p79
      %p82 = scmp.ne.s32.totalorder %s67, %s81
      %p83 = scmp.eq.s32.totalorder %s22, 0
      %p84 = por %p82, %p83
      %s85 = ssub.s32 %s23, %s35
      %p86 = scmp.eq.s32.totalorder %s85, 0
      %s88 = sadd.s32 %s87, 1
      %s89 = scalar_select %p86, %s87, %s88
      %p92 = pneg %p86
      %p93 = scmp.eq.s32.totalorder %s16, 1
      %p94 = por %p92, %p93
      %p95 = scmp.ne.s32.totalorder %s87, %s90
      %p96 = scmp.eq.s32.totalorder %s16, 0
      %p97 = por %p95, %p96
      %p98 = scmp.ne.s32.totalorder %s87, %s90
      %p99 = scmp.eq.s32.totalorder %s21, 1
      %p100 = por %p98, %p99
      %p101 = scmp.ne.s32.totalorder %s90, %s91
      %p102 = scmp.eq.s32.totalorder %s21, 0
      %p103 = por %p101, %p102
      %p104 = scmp.ne.s32.totalorder %s90, %s91
      %p105 = scmp.eq.s32.totalorder %s22, 1
      %p106 = por %p104, %p105
      %p108 = scmp.ne.s32.totalorder %s91, %s107
      %p109 = scmp.eq.s32.totalorder %s22, 0
      %p110 = por %p108, %p109
      %s111 = sadd.s32 %s24, %s23
      %s112 = sadd.s32 %s31, %s35
      %s113 = ssub.s32 %s111, %s112
      %p114 = scmp.eq.s32.totalorder %s113, 0
      %s116 = sadd.s32 %s115, 1
      %s117 = scalar_select %p114, %s115, %s116
      %p120 = pneg %p114
      %p121 = scmp.eq.s32.totalorder %s16, 1
      %p122 = por %p120, %p121
      %p123 = scmp.ne.s32.totalorder %s115, %s118
      %p124 = scmp.eq.s32.totalorder %s16, 0
      %p125 = por %p123, %p124
      %p126 = scmp.ne.s32.totalorder %s115, %s118
      %p127 = scmp.eq.s32.totalorder %s21, 1
      %p128 = por %p126, %p127
      %p129 = scmp.ne.s32.totalorder %s118, %s119
      %p130 = scmp.eq.s32.totalorder %s21, 0
      %p131 = por %p129, %p130
      %p132 = scmp.ne.s32.totalorder %s118, %s119
      %p133 = scmp.eq.s32.totalorder %s22, 1
      %p134 = por %p132, %p133
      %p136 = scmp.ne.s32.totalorder %s119, %s135
      %p137 = scmp.eq.s32.totalorder %s22, 0
      %p138 = por %p136, %p137
      %p139 = scmp.le.s32.totalorder 1, %s16
      %p140 = scmp.lt.s32.totalorder %s16, 3
      %p141 = pnand %p139, %p140
      %p142 = pneg %p141
      // Predicated region
      $region9: #{patch_embed.1} parent=5 // pred_check
        _
      $region10: #{patch_embed.1} parent=5 // pred_check_branch
        %144 = sbr.rel (%p141) target = $region12
      $region11: #{patch_embed.1} parent=5 // pred_region
        %s145 = ssub.s32 %s16, 1
        // Predicated region
        $region13: #{patch_embed.1} parent=11 // pred_check
          %p146 = pneg %p77
        $region14: #{patch_embed.1} parent=11 // pred_check_branch
          %148 = sbr.rel (%p146) target = $region16
        $region15: #{patch_embed.1} parent=11 // pred_region
          %s150 = ssub.s32 256, 256
          %151 = vsyncadd [#allocation6], %s150
          %s152 = sshll.u32 [#allocation5], 4
          %s153 = int_to_ptr.vmem [resolvable:$true] %s152
          %158 = dma.hbm_to_vmem [thread:$0]  %s1, 256, %s153, [#allocation6], 128, 128, 8
        $region16: #{patch_embed.1} parent=11 // pred_fallthru
          _
        // Predicated region
        $region17: #{patch_embed.1} parent=11 // pred_check
          %p159 = pneg %p103
        $region18: #{patch_embed.1} parent=11 // pred_check_branch
          %161 = sbr.rel (%p159) target = $region20
        $region19: #{patch_embed.1} parent=11 // pred_region
          %s162 = smul.u32 32, %s25
          %s164 = ssub.s32 4096, 4096
          %165 = vsyncadd [#allocation6], %s164
          %s166 = smul.addr %s162, 128
          %s167 = scalar_lea.hbm %s2, %s166
          %s168 = sshll.u32 [#allocation7], 4
          %s169 = int_to_ptr.vmem [resolvable:$true] %s168
          %174 = dma.hbm_to_vmem [thread:$0]  %s167, 4096, %s169, [#allocation6], 128, 128, 8
        $region20: #{patch_embed.1} parent=11 // pred_fallthru
          _
      $region12: #{patch_embed.1} parent=5 // pred_fallthru
        _
      %p175 = scmp.lt.s32.totalorder %s16, 2
      // Predicated region
      $region21: #{patch_embed.1} parent=5 // pred_check
        %p176 = pneg %p175
      $region22: #{patch_embed.1} parent=5 // pred_check_branch
        %178 = sbr.rel (%p176) target = $region24
      $region23: #{patch_embed.1} parent=5 // pred_region
        // Predicated region
        $region25: #{patch_embed.1} parent=23 // pred_check
          %p179 = pneg %p50
        $region26: #{patch_embed.1} parent=23 // pred_check_branch
          %181 = sbr.rel (%p179) target = $region28
        $region27: #{patch_embed.1} parent=23 // pred_region
          %s182 = sand.u32 %s40, 1
          %s183 = scalar_lea.sflag [#allocation3], %s182
          %s184 = sand.u32 %s40, 1
          %s185 = smul.addr %s184, 256
          %s186 = scalar_lea.vmem [#allocation2], %s185
          %s187 = sadd.s32 %s24, %s23
          %s188 = smul.u32 32, %s187
          %s190 = ssub.s32 4096, 4096
          %191 = vsyncadd %s183, %s190
          %s192 = smul.addr %s188, 128
          %s193 = scalar_lea.hbm %s0, %s192
          %s194 = sshll.u32 %s186, 4
          %s195 = int_to_ptr.vmem [resolvable:$true] %s194
          %200 = dma.hbm_to_vmem [thread:$0]  %s193, 4096, %s195, %s183, 128, 128, 8
        $region28: #{patch_embed.1} parent=23 // pred_fallthru
          _
      $region24: #{patch_embed.1} parent=5 // pred_fallthru
        _
      %p201 = scmp.le.s32.totalorder 1, %s16
      %p202 = scmp.lt.s32.totalorder %s16, 3
      %p203 = pnand %p201, %p202
      %p204 = pneg %p203
      // Predicated region
      $region29: #{patch_embed.1} parent=5 // pred_check
        _
      $region30: #{patch_embed.1} parent=5 // pred_check_branch
        %206 = sbr.rel (%p203) target = $region32
      $region31: #{patch_embed.1} parent=5 // pred_region
        %s207 = ssub.s32 %s16, 1
        %s208 = sand.u32 %s43, 1
        %s209 = scalar_lea.sflag [#allocation3], %s208
        %s210 = sand.u32 %s43, 1
        %s211 = smul.addr %s210, 256
        %s212 = scalar_lea.vmem [#allocation2], %s211
        // Predicated region
        $region33: #{patch_embed.1} parent=31 // pred_check
          %p213 = pneg %p56
        $region34: #{patch_embed.1} parent=31 // pred_check_branch
          %215 = sbr.rel (%p213) target = $region36
        $region35: #{patch_embed.1} parent=31 // pred_region
          %216 = dma.done %s209, 4096
        $region36: #{patch_embed.1} parent=31 // pred_fallthru
          _
        // Predicated region
        $region37: #{patch_embed.1} parent=31 // pred_check
          %p217 = pneg %p77
        $region38: #{patch_embed.1} parent=31 // pred_check_branch
          %219 = sbr.rel (%p217) target = $region40
        $region39: #{patch_embed.1} parent=31 // pred_region
          %220 = dma.done [#allocation6], 256
        $region40: #{patch_embed.1} parent=31 // pred_fallthru
          _
        // Predicated region
        $region41: #{patch_embed.1} parent=31 // pred_check
          %p221 = pneg %p103
        $region42: #{patch_embed.1} parent=31 // pred_check_branch
          %223 = sbr.rel (%p221) target = $region44
        $region43: #{patch_embed.1} parent=31 // pred_region
          %224 = dma.done [#allocation6], 4096
        $region44: #{patch_embed.1} parent=31 // pred_fallthru
          _
        %s225 = sand.u32 %s43, 1
        %s226 = scalar_lea.sflag [#allocation3], %s225
        %s227 = sand.u32 %s43, 1
        %s228 = smul.addr %s227, 256
        %s229 = scalar_lea.vmem [#allocation2], %s228
        %p230 = pneg %p56
        %p231 = pneg %p53
        %p232 = pneg %p77
        %p233 = pneg %p74
        %p234 = pneg %p103
        %p235 = pneg %p100
        %p236 = pneg %p131
        %p237 = pneg %p128
        %s238 = sand.u32 %s118, 1
        %s239 = scalar_lea.sflag [#allocation4], %s238
        %s240 = sand.u32 %s118, 1
        %s241 = smul.addr %s240, 256
        %s242 = scalar_lea.vmem [#allocation8], %s241
        %s243 = sadd.s32 %s26, %s25
        %s244 = smul.u32 32, %s243
        %s245 = smul.u32 32, %s25
        %s246 = sadd.s32 %s26, %s25
        %s247 = smul.u32 32, %s246
        %v248 = vld [vmem:[%s212] sm:$0xff]
        %v249 = vld [vmem:[%s212 + $0x8] sm:$0xff]
        %v250 = vld [vmem:[%s212 + $0x10] sm:$0xff]
        %v251 = vld [vmem:[%s212 + $0x18] sm:$0xff]
        %v252 = vld [vmem:[%s212 + $0x20] sm:$0xff]
        %v253 = vld [vmem:[%s212 + $0x28] sm:$0xff]
        %v254 = vld [vmem:[%s212 + $0x30] sm:$0xff]
        %v255 = vld [vmem:[%s212 + $0x38] sm:$0xff]
        %v256 = vld [vmem:[%s212 + $0x40] sm:$0xff]
        %v257 = vld [vmem:[%s212 + $0x48] sm:$0xff]
        %v258 = vld [vmem:[%s212 + $0x50] sm:$0xff]
        %v259 = vld [vmem:[%s212 + $0x58] sm:$0xff]
        %v260 = vld [vmem:[%s212 + $0x60] sm:$0xff]
        %v261 = vld [vmem:[%s212 + $0x68] sm:$0xff]
        %v262 = vld [vmem:[%s212 + $0x70] sm:$0xff]
        %v263 = vld [vmem:[%s212 + $0x78] sm:$0xff]
        %v264 = vld [vmem:[%s212 + $0x80] sm:$0xff]
        %v265 = vld [vmem:[%s212 + $0x88] sm:$0xff]
        %v266 = vld [vmem:[%s212 + $0x90] sm:$0xff]
        %v267 = vld [vmem:[%s212 + $0x98] sm:$0xff]
        %v268 = vld [vmem:[%s212 + $0xa0] sm:$0xff]
        %v269 = vld [vmem:[%s212 + $0xa8] sm:$0xff]
        %v270 = vld [vmem:[%s212 + $0xb0] sm:$0xff]
        %v271 = vld [vmem:[%s212 + $0xb8] sm:$0xff]
        %v272 = vld [vmem:[%s212 + $0xc0] sm:$0xff]
        %v273 = vld [vmem:[%s212 + $0xc8] sm:$0xff]
        %v274 = vld [vmem:[%s212 + $0xd0] sm:$0xff]
        %v275 = vld [vmem:[%s212 + $0xd8] sm:$0xff]
        %v276 = vld [vmem:[%s212 + $0xe0] sm:$0xff]
        %v277 = vld [vmem:[%s212 + $0xe8] sm:$0xff]
        %v278 = vld [vmem:[%s212 + $0xf0] sm:$0xff]
        %v279 = vld [vmem:[%s212 + $0xf8] sm:$0xff]
        %v280 = vld [vmem:[#allocation5] sm:$0xff]
        %v281 = vld [vmem:[#allocation5 + $0x8] sm:$0xff]
        %v282 = vld [vmem:[#allocation7] sm:$0xff]
        %v283 = vld [vmem:[#allocation7 + $0x8] sm:$0xff]
        %v284 = vld [vmem:[#allocation7 + $0x10] sm:$0xff]
        %v285 = vld [vmem:[#allocation7 + $0x18] sm:$0xff]
        %v286 = vld [vmem:[#allocation7 + $0x20] sm:$0xff]
        %v287 = vld [vmem:[#allocation7 + $0x28] sm:$0xff]
        %v288 = vld [vmem:[#allocation7 + $0x30] sm:$0xff]
        %v289 = vld [vmem:[#allocation7 + $0x38] sm:$0xff]
        %v290 = vld [vmem:[#allocation7 + $0x40] sm:$0xff]
        %v291 = vld [vmem:[#allocation7 + $0x48] sm:$0xff]
        %v292 = vld [vmem:[#allocation7 + $0x50] sm:$0xff]
        %v293 = vld [vmem:[#allocation7 + $0x58] sm:$0xff]
        %v294 = vld [vmem:[#allocation7 + $0x60] sm:$0xff]
        %v295 = vld [vmem:[#allocation7 + $0x68] sm:$0xff]
        %v296 = vld [vmem:[#allocation7 + $0x70] sm:$0xff]
        %v297 = vld [vmem:[#allocation7 + $0x78] sm:$0xff]
        %v298 = vld [vmem:[#allocation7 + $0x80] sm:$0xff]
        %v299 = vld [vmem:[#allocation7 + $0x88] sm:$0xff]
        %v300 = vld [vmem:[#allocation7 + $0x90] sm:$0xff]
        %v301 = vld [vmem:[#allocation7 + $0x98] sm:$0xff]
        %v302 = vld [vmem:[#allocation7 + $0xa0] sm:$0xff]
        %v303 = vld [vmem:[#allocation7 + $0xa8] sm:$0xff]
        %v304 = vld [vmem:[#allocation7 + $0xb0] sm:$0xff]
        %v305 = vld [vmem:[#allocation7 + $0xb8] sm:$0xff]
        %v306 = vld [vmem:[#allocation7 + $0xc0] sm:$0xff]
        %v307 = vld [vmem:[#allocation7 + $0xc8] sm:$0xff]
        %v308 = vld [vmem:[#allocation7 + $0xd0] sm:$0xff]
        %v309 = vld [vmem:[#allocation7 + $0xd8] sm:$0xff]
        %v310 = vld [vmem:[#allocation7 + $0xe0] sm:$0xff]
        %v311 = vld [vmem:[#allocation7 + $0xe8] sm:$0xff]
        %v312 = vld [vmem:[#allocation7 + $0xf0] sm:$0xff]
        %v313 = vld [vmem:[#allocation7 + $0xf8] sm:$0xff]
        %vm314 = vcmask 130048
        %v316 = vsel %vm314, %v248, 0
        %v319 = vsel %vm314, %v249, 0
        %v322 = vsel %vm314, %v250, 0
        %v325 = vsel %vm314, %v251, 0
        %v328 = vsel %vm314, %v252, 0
        %v331 = vsel %vm314, %v253, 0
        %v334 = vsel %vm314, %v254, 0
        %v337 = vsel %vm314, %v255, 0
        %v340 = vsel %vm314, %v256, 0
        %v343 = vsel %vm314, %v257, 0
        %v346 = vsel %vm314, %v258, 0
        %v349 = vsel %vm314, %v259, 0
        %v352 = vsel %vm314, %v260, 0
        %v355 = vsel %vm314, %v261, 0
        %v358 = vsel %vm314, %v262, 0
        %v361 = vsel %vm314, %v263, 0
        %v364 = vsel %vm314, %v264, 0
        %v367 = vsel %vm314, %v265, 0
        %v370 = vsel %vm314, %v266, 0
        %v373 = vsel %vm314, %v267, 0
        %v376 = vsel %vm314, %v268, 0
        %v379 = vsel %vm314, %v269, 0
        %v382 = vsel %vm314, %v270, 0
        %v385 = vsel %vm314, %v271, 0
        %v388 = vsel %vm314, %v272, 0
        %v391 = vsel %vm314, %v273, 0
        %v394 = vsel %vm314, %v274, 0
        %v397 = vsel %vm314, %v275, 0
        %v400 = vsel %vm314, %v276, 0
        %v403 = vsel %vm314, %v277, 0
        %v406 = vsel %vm314, %v278, 0
        %v409 = vsel %vm314, %v279, 0
        %411 = vmatprep.subr.mxu0 0.0
        %412 = vmatpush1.msra.mxu0 %v280
        %413 = vmatprep.subr.mxu0 0.0
        %414 = vmatpush1.msra.mxu0 %v281
        %415 = vmatprep.subr.mxu0 0.0
        %416 = vmatpush1.msra.mxu0 0.0
        %417 = vmatprep.subr.mxu0 0.0
        %418 = vmatpush1.msra.mxu0 0.0
        %419 = vmatprep.subr.mxu0 0.0
        %420 = vmatpush1.msra.mxu0 0.0
        %421 = vmatprep.subr.mxu0 0.0
        %422 = vmatpush1.msra.mxu0 0.0
        %423 = vmatprep.subr.mxu0 0.0
        %424 = vmatpush1.msra.mxu0 0.0
        %425 = vmatprep.subr.mxu0 0.0
        %426 = vmatpush1.msra.mxu0 0.0
        %427 = vmatprep.subr.mxu0 0.0
        %428 = vmatpush1.msra.mxu0 0.0
        %429 = vmatprep.subr.mxu0 0.0
        %430 = vmatpush1.msra.mxu0 0.0
        %431 = vmatprep.subr.mxu0 0.0
        %432 = vmatpush1.msra.mxu0 0.0
        %433 = vmatprep.subr.mxu0 0.0
        %434 = vmatpush1.msra.mxu0 0.0
        %435 = vmatprep.subr.mxu0 0.0
        %436 = vmatpush1.msra.mxu0 0.0
        %437 = vmatprep.subr.mxu0 0.0
        %438 = vmatpush1.msra.mxu0 0.0
        %439 = vmatprep.subr.mxu0 0.0
        %440 = vmatpush1.msra.mxu0 0.0
        %441 = vmatprep.subr.mxu0 0.0
        %442 = vmatpush1.msra.mxu0 0.0
        %443 = vmatprep.subr.mxu0 0.0
        %444 = vmatpush1.msra.mxu0 0.0
        %445 = vmatprep.subr.mxu0 0.0
        %446 = vmatpush1.msra.mxu0 0.0
        %447 = vmatprep.subr.mxu0 0.0
        %448 = vmatpush1.msra.mxu0 0.0
        %449 = vmatprep.subr.mxu0 0.0
        %450 = vmatpush1.msra.mxu0 0.0
        %451 = vmatprep.subr.mxu0 0.0
        %452 = vmatpush1.msra.mxu0 0.0
        %453 = vmatprep.subr.mxu0 0.0
        %454 = vmatpush1.msra.mxu0 0.0
        %455 = vmatprep.subr.mxu0 0.0
        %456 = vmatpush1.msra.mxu0 0.0
        %457 = vmatprep.subr.mxu0 0.0
        %458 = vmatpush1.msra.mxu0 0.0
        %459 = vmatprep.subr.mxu0 0.0
        %460 = vmatpush1.msra.mxu0 0.0
        %461 = vmatprep.subr.mxu0 0.0
        %462 = vmatpush1.msra.mxu0 0.0
        %463 = vmatprep.subr.mxu0 0.0
        %464 = vmatpush1.msra.mxu0 0.0
        %465 = vmatprep.subr.mxu0 0.0
        %466 = vmatpush1.msra.mxu0 0.0
        %467 = vmatprep.subr.mxu0 0.0
        %468 = vmatpush1.msra.mxu0 0.0
        %469 = vmatprep.subr.mxu0 0.0
        %470 = vmatpush1.msra.mxu0 0.0
        %471 = vmatprep.subr.mxu0 0.0
        %472 = vmatpush1.msra.mxu0 0.0
        %473 = vmatprep.subr.mxu0 0.0
        %474 = vmatpush1.msra.mxu0 0.0
        %475 = vmatprep.mubr.f32.mxu0 0.0
        %476 = vmatmul.mubr.f32.gmra.mrb[0].mxu0 %v316
        %v477 = vpop.f32.mrb[0].mxu0
        %v478 = vadd.f32 %v282, %v477
        %v479 = vpop.f32.mrb[0].mxu0
        %480 = vmatprep.mubr.f32.mxu0 0.0
        %481 = vmatmul.mubr.f32.gmra.mrb[0].mxu0 %v319
        %v482 = vpop.f32.mrb[0].mxu0
        %v483 = vadd.f32 %v283, %v482
        %v484 = vpop.f32.mrb[0].mxu0
        %485 = vmatprep.mubr.f32.mxu0 0.0
        %486 = vmatmul.mubr.f32.gmra.mrb[0].mxu0 %v322
        %v487 = vpop.f32.mrb[0].mxu0
        %v488 = vadd.f32 %v284, %v487
        %v489 = vpop.f32.mrb[0].mxu0
        %490 = vmatprep.mubr.f32.mxu0 0.0
        %491 = vmatmul.mubr.f32.gmra.mrb[0].mxu0 %v325
        %v492 = vpop.f32.mrb[0].mxu0
        %v493 = vadd.f32 %v285, %v492
        %v494 = vpop.f32.mrb[0].mxu0
        %495 = vmatprep.mubr.f32.mxu0 0.0
        %496 = vmatmul.mubr.f32.gmra.mrb[0].mxu0 %v328
        %v497 = vpop.f32.mrb[0].mxu0
        %v498 = vadd.f32 %v286, %v497
        %v499 = vpop.f32.mrb[0].mxu0
        %500 = vmatprep.mubr.f32.mxu0 0.0
        %501 = vmatmul.mubr.f32.gmra.mrb[0].mxu0 %v331
        %v502 = vpop.f32.mrb[0].mxu0
        %v503 = vadd.f32 %v287, %v502
        %v504 = vpop.f32.mrb[0].mxu0
        %505 = vmatprep.mubr.f32.mxu0 0.0
        %506 = vmatmul.mubr.f32.gmra.mrb[0].mxu0 %v334
        %v507 = vpop.f32.mrb[0].mxu0
        %v508 = vadd.f32 %v288, %v507
        %v509 = vpop.f32.mrb[0].mxu0
        %510 = vmatprep.mubr.f32.mxu0 0.0
        %511 = vmatmul.mubr.f32.gmra.mrb[0].mxu0 %v337
        %v512 = vpop.f32.mrb[0].mxu0
        %v513 = vadd.f32 %v289, %v512
        %v514 = vpop.f32.mrb[0].mxu0
        %515 = vmatprep.mubr.f32.mxu0 0.0
        %516 = vmatmul.mubr.f32.gmra.mrb[0].mxu0 %v340
        %v517 = vpop.f32.mrb[0].mxu0
        %v518 = vadd.f32 %v290, %v517
        %v519 = vpop.f32.mrb[0].mxu0
        %520 = vmatprep.mubr.f32.mxu0 0.0
        %521 = vmatmul.mubr.f32.gmra.mrb[0].mxu0 %v343
        %v522 = vpop.f32.mrb[0].mxu0
        %v523 = vadd.f32 %v291, %v522
        %v524 = vpop.f32.mrb[0].mxu0
        %525 = vmatprep.mubr.f32.mxu0 0.0
        %526 = vmatmul.mubr.f32.gmra.mrb[0].mxu0 %v346
        %v527 = vpop.f32.mrb[0].mxu0
        %v528 = vadd.f32 %v292, %v527
        %v529 = vpop.f32.mrb[0].mxu0
        %530 = vmatprep.mubr.f32.mxu0 0.0
        %531 = vmatmul.mubr.f32.gmra.mrb[0].mxu0 %v349
        %v532 = vpop.f32.mrb[0].mxu0
        %v533 = vadd.f32 %v293, %v532
        %v534 = vpop.f32.mrb[0].mxu0
        %535 = vmatprep.mubr.f32.mxu0 0.0
        %536 = vmatmul.mubr.f32.gmra.mrb[0].mxu0 %v352
        %v537 = vpop.f32.mrb[0].mxu0
        %v538 = vadd.f32 %v294, %v537
        %v539 = vpop.f32.mrb[0].mxu0
        %540 = vmatprep.mubr.f32.mxu0 0.0
        %541 = vmatmul.mubr.f32.gmra.mrb[0].mxu0 %v355
        %v542 = vpop.f32.mrb[0].mxu0
        %v543 = vadd.f32 %v295, %v542
        %v544 = vpop.f32.mrb[0].mxu0
        %545 = vmatprep.mubr.f32.mxu0 0.0
        %546 = vmatmul.mubr.f32.gmra.mrb[0].mxu0 %v358
        %v547 = vpop.f32.mrb[0].mxu0
        %v548 = vadd.f32 %v296, %v547
        %v549 = vpop.f32.mrb[0].mxu0
        %550 = vmatprep.mubr.f32.mxu0 0.0
        %551 = vmatmul.mubr.f32.gmra.mrb[0].mxu0 %v361
        %v552 = vpop.f32.mrb[0].mxu0
        %v553 = vadd.f32 %v297, %v552
        %v554 = vpop.f32.mrb[0].mxu0
        %555 = vmatprep.mubr.f32.mxu0 0.0
        %556 = vmatmul.mubr.f32.gmra.mrb[0].mxu0 %v364
        %v557 = vpop.f32.mrb[0].mxu0
        %v558 = vadd.f32 %v298, %v557
        %v559 = vpop.f32.mrb[0].mxu0
        %560 = vmatprep.mubr.f32.mxu0 0.0
        %561 = vmatmul.mubr.f32.gmra.mrb[0].mxu0 %v367
        %v562 = vpop.f32.mrb[0].mxu0
        %v563 = vadd.f32 %v299, %v562
        %v564 = vpop.f32.mrb[0].mxu0
        %565 = vmatprep.mubr.f32.mxu0 0.0
        %566 = vmatmul.mubr.f32.gmra.mrb[0].mxu0 %v370
        %v567 = vpop.f32.mrb[0].mxu0
        %v568 = vadd.f32 %v300, %v567
        %v569 = vpop.f32.mrb[0].mxu0
        %570 = vmatprep.mubr.f32.mxu0 0.0
        %571 = vmatmul.mubr.f32.gmra.mrb[0].mxu0 %v373
        %v572 = vpop.f32.mrb[0].mxu0
        %v573 = vadd.f32 %v301, %v572
        %v574 = vpop.f32.mrb[0].mxu0
        %575 = vmatprep.mubr.f32.mxu0 0.0
        %576 = vmatmul.mubr.f32.gmra.mrb[0].mxu0 %v376
        %v577 = vpop.f32.mrb[0].mxu0
        %v578 = vadd.f32 %v302, %v577
        %v579 = vpop.f32.mrb[0].mxu0
        %580 = vmatprep.mubr.f32.mxu0 0.0
        %581 = vmatmul.mubr.f32.gmra.mrb[0].mxu0 %v379
        %v582 = vpop.f32.mrb[0].mxu0
        %v583 = vadd.f32 %v303, %v582
        %v584 = vpop.f32.mrb[0].mxu0
        %585 = vmatprep.mubr.f32.mxu0 0.0
        %586 = vmatmul.mubr.f32.gmra.mrb[0].mxu0 %v382
        %v587 = vpop.f32.mrb[0].mxu0
        %v588 = vadd.f32 %v304, %v587
        %v589 = vpop.f32.mrb[0].mxu0
        %590 = vmatprep.mubr.f32.mxu0 0.0
        %591 = vmatmul.mubr.f32.gmra.mrb[0].mxu0 %v385
        %v592 = vpop.f32.mrb[0].mxu0
        %v593 = vadd.f32 %v305, %v592
        %v594 = vpop.f32.mrb[0].mxu0
        %595 = vmatprep.mubr.f32.mxu0 0.0
        %596 = vmatmul.mubr.f32.gmra.mrb[0].mxu0 %v388
        %v597 = vpop.f32.mrb[0].mxu0
        %v598 = vadd.f32 %v306, %v597
        %v599 = vpop.f32.mrb[0].mxu0
        %600 = vmatprep.mubr.f32.mxu0 0.0
        %601 = vmatmul.mubr.f32.gmra.mrb[0].mxu0 %v391
        %v602 = vpop.f32.mrb[0].mxu0
        %v603 = vadd.f32 %v307, %v602
        %v604 = vpop.f32.mrb[0].mxu0
        %605 = vmatprep.mubr.f32.mxu0 0.0
        %606 = vmatmul.mubr.f32.gmra.mrb[0].mxu0 %v394
        %v607 = vpop.f32.mrb[0].mxu0
        %v608 = vadd.f32 %v308, %v607
        %v609 = vpop.f32.mrb[0].mxu0
        %610 = vmatprep.mubr.f32.mxu0 0.0
        %611 = vmatmul.mubr.f32.gmra.mrb[0].mxu0 %v397
        %v612 = vpop.f32.mrb[0].mxu0
        %v613 = vadd.f32 %v309, %v612
        %v614 = vpop.f32.mrb[0].mxu0
        %615 = vmatprep.mubr.f32.mxu0 0.0
        %616 = vmatmul.mubr.f32.gmra.mrb[0].mxu0 %v400
        %v617 = vpop.f32.mrb[0].mxu0
        %v618 = vadd.f32 %v310, %v617
        %v619 = vpop.f32.mrb[0].mxu0
        %620 = vmatprep.mubr.f32.mxu0 0.0
        %621 = vmatmul.mubr.f32.gmra.mrb[0].mxu0 %v403
        %v622 = vpop.f32.mrb[0].mxu0
        %v623 = vadd.f32 %v311, %v622
        %v624 = vpop.f32.mrb[0].mxu0
        %625 = vmatprep.mubr.f32.mxu0 0.0
        %626 = vmatmul.mubr.f32.gmra.mrb[0].mxu0 %v406
        %v627 = vpop.f32.mrb[0].mxu0
        %v628 = vadd.f32 %v312, %v627
        %v629 = vpop.f32.mrb[0].mxu0
        %630 = vmatprep.mubr.f32.mxu0 0.0
        %631 = vmatmul.mubr.f32.gmra.mrb[0].mxu0 %v409
        %v632 = vpop.f32.mrb[0].mxu0
        %v633 = vadd.f32 %v313, %v632
        %v634 = vpop.f32.mrb[0].mxu0
        %635 = vdwg.mxu0
        %vm636 = vcmask 261120
        %637 = vst.msk [vmem:[%s242] sm:$0xff] %vm636, %v478
        %638 = vst.msk [vmem:[%s242 + $0x8] sm:$0xff] %vm636, %v483
        %639 = vst.msk [vmem:[%s242 + $0x10] sm:$0xff] %vm636, %v488
        %640 = vst.msk [vmem:[%s242 + $0x18] sm:$0xff] %vm636, %v493
        %641 = vst.msk [vmem:[%s242 + $0x20] sm:$0xff] %vm636, %v498
        %642 = vst.msk [vmem:[%s242 + $0x28] sm:$0xff] %vm636, %v503
        %643 = vst.msk [vmem:[%s242 + $0x30] sm:$0xff] %vm636, %v508
        %644 = vst.msk [vmem:[%s242 + $0x38] sm:$0xff] %vm636, %v513
        %645 = vst.msk [vmem:[%s242 + $0x40] sm:$0xff] %vm636, %v518
        %646 = vst.msk [vmem:[%s242 + $0x48] sm:$0xff] %vm636, %v523
        %647 = vst.msk [vmem:[%s242 + $0x50] sm:$0xff] %vm636, %v528
        %648 = vst.msk [vmem:[%s242 + $0x58] sm:$0xff] %vm636, %v533
        %649 = vst.msk [vmem:[%s242 + $0x60] sm:$0xff] %vm636, %v538
        %650 = vst.msk [vmem:[%s242 + $0x68] sm:$0xff] %vm636, %v543
        %651 = vst.msk [vmem:[%s242 + $0x70] sm:$0xff] %vm636, %v548
        %652 = vst.msk [vmem:[%s242 + $0x78] sm:$0xff] %vm636, %v553
        %653 = vst.msk [vmem:[%s242 + $0x80] sm:$0xff] %vm636, %v558
        %654 = vst.msk [vmem:[%s242 + $0x88] sm:$0xff] %vm636, %v563
        %655 = vst.msk [vmem:[%s242 + $0x90] sm:$0xff] %vm636, %v568
        %656 = vst.msk [vmem:[%s242 + $0x98] sm:$0xff] %vm636, %v573
        %657 = vst.msk [vmem:[%s242 + $0xa0] sm:$0xff] %vm636, %v578
        %658 = vst.msk [vmem:[%s242 + $0xa8] sm:$0xff] %vm636, %v583
        %659 = vst.msk [vmem:[%s242 + $0xb0] sm:$0xff] %vm636, %v588
        %660 = vst.msk [vmem:[%s242 + $0xb8] sm:$0xff] %vm636, %v593
        %661 = vst.msk [vmem:[%s242 + $0xc0] sm:$0xff] %vm636, %v598
        %662 = vst.msk [vmem:[%s242 + $0xc8] sm:$0xff] %vm636, %v603
        %663 = vst.msk [vmem:[%s242 + $0xd0] sm:$0xff] %vm636, %v608
        %664 = vst.msk [vmem:[%s242 + $0xd8] sm:$0xff] %vm636, %v613
        %665 = vst.msk [vmem:[%s242 + $0xe0] sm:$0xff] %vm636, %v618
        %666 = vst.msk [vmem:[%s242 + $0xe8] sm:$0xff] %vm636, %v623
        %667 = vst.msk [vmem:[%s242 + $0xf0] sm:$0xff] %vm636, %v628
        %668 = vst.msk [vmem:[%s242 + $0xf8] sm:$0xff] %vm636, %v633
        %s669 = sand.u32 %s118, 1
        %s670 = scalar_lea.sflag [#allocation4], %s669
        %s671 = sand.u32 %s118, 1
        %s672 = smul.addr %s671, 256
        %s673 = scalar_lea.vmem [#allocation8], %s672
        // Predicated region
        $region45: #{patch_embed.1} parent=31 // pred_check
          %p674 = pneg %p128
        $region46: #{patch_embed.1} parent=31 // pred_check_branch
          %676 = sbr.rel (%p674) target = $region48
        $region47: #{patch_embed.1} parent=31 // pred_region
          %s677 = sadd.s32 %s26, %s25
          %s678 = smul.u32 32, %s677
          %s680 = ssub.s32 4096, 4096
          %681 = vsyncadd %s670, %s680
          %s682 = smul.addr %s678, 128
          %s683 = scalar_lea.hbm %s3, %s682
          %s684 = sshll.u32 %s673, 4
          %s685 = int_to_ptr.vmem [resolvable:$true] %s684
          %690 = dma.vmem_to_hbm [thread:$0]  %s685, 4096, %s683, %s670, 128, 128, 8
        $region48: #{patch_embed.1} parent=31 // pred_fallthru
          _
      $region32: #{patch_embed.1} parent=5 // pred_fallthru
        _
      %p691 = scmp.le.s32.totalorder 2, %s16
      // Predicated region
      $region49: #{patch_embed.1} parent=5 // pred_check
        %p692 = pneg %p691
      $region50: #{patch_embed.1} parent=5 // pred_check_branch
        %694 = sbr.rel (%p692) target = $region52
      $region51: #{patch_embed.1} parent=5 // pred_region
        %s695 = ssub.s32 %s16, 2
        // Predicated region
        $region53: #{patch_embed.1} parent=51 // pred_check
          %p696 = pneg %p134
        $region54: #{patch_embed.1} parent=51 // pred_check_branch
          %698 = sbr.rel (%p696) target = $region56
        $region55: #{patch_embed.1} parent=51 // pred_region
          %s699 = sand.u32 %s119, 1
          %s700 = scalar_lea.sflag [#allocation4], %s699
          %s701 = sand.u32 %s119, 1
          %s702 = smul.addr %s701, 256
          %s703 = scalar_lea.vmem [#allocation8], %s702
          %704 = dma.done %s700, 4096
        $region56: #{patch_embed.1} parent=51 // pred_fallthru
          _
      $region52: #{patch_embed.1} parent=5 // pred_fallthru
        _
    $region6: #{patch_embed.1} parent=1 // loop_footer
      %s20 = sadd.s32 1, %s16
    $region7: #{patch_embed.1} parent=1 // loop_footer_branch
      %15 = sbr.rel target = $region3
    $region8: #{patch_embed.1} parent=1 // loop_exit
      _
    %705 = vsyncpa [#allocation3], 1
    %s706 = scalar_lea.sflag [#allocation3], 1
    %707 = vsyncpa %s706, 1
    %708 = vsyncpa [#allocation6], 1
    %709 = vsyncpa [#allocation4], 1
    %s710 = scalar_lea.sflag [#allocation4], 1
    %711 = vsyncpa %s710, 1

</llo_original>
